<compile_context>
chip_gen: v7x
topology: tpu7x:2x2x1
jax: 0.10.0
libtpu: 0.0.40
codegen_flags: <defaults>
</compile_context>

<pallas_src>
import functools

import jax
import jax.numpy as jnp
from jax import lax
from jax.experimental import pallas as pl
from jax.experimental.pallas import tpu as pltpu

KERNEL_SIZE = 3
PAD = 1  # module defaults: stride=1, padding=1, dilation=1


def _sepconv_kernel(x_ref, w_ref, o_ref, *, H, Wp, bt):
    """One batch-tile per grid step, single fused MXU matmul.

    x_ref : (bt, C, L)         zero-padded flattened images; L = (H+2)*Wp + 2
    w_ref : (Cout, 9*C)        fused weights W[o, k*C + c] = pw[o, c] * dw[c, k]
    o_ref : (Cout, bt*H*Wp)    row-band outputs (padded border columns included,
                               discarded by the wrapper)
    """
    n_img = H * Wp
    base = Wp + 1                          # flat index of padded (row=1, col=0)

    cols = []
    for b in range(bt):
        xb = x_ref[b]                      # (C, L)
        taps = []
        for dy in (-1, 0, 1):
            for dx in (-1, 0, 1):
                s = base + dy * Wp + dx              # static, always in bounds
                taps.append(xb[:, s:s + n_img])      # (C, n_img), unmasked
        cols.append(jnp.concatenate(taps, axis=0))   # (9C, n_img)
    op = cols[0] if bt == 1 else jnp.concatenate(cols, axis=1)   # (9C, bt*n_img)

    out = jnp.dot(w_ref[...], op, preferred_element_type=jnp.float32)
    o_ref[...] = out.astype(o_ref.dtype)


def _pick_batch_tile(B, cap=8):
    """Largest divisor of B not exceeding `cap` (images per grid step)."""
    bt = 1
    for d in range(1, min(B, cap) + 1):
        if B % d == 0:
            bt = d
    return bt


def separable_conv2d(x, dw_weight, pw_weight):
    """x: (B, C, H, W) NCHW.  dw_weight: (C, 1, 3, 3).  pw_weight: (Cout, C, 1, 1)."""
    B, C, H, W = x.shape
    Cout = pw_weight.shape[0]
    Hp, Wp = H + 2 * PAD, W + 2 * PAD
    n_img = H * Wp                         # per-image output-window length
    L = Hp * Wp + 2                        # flat padded length (+1 halo elem per side)

    # Wrapper-side halo (layout plumbing, plain JAX): spatial zero border + one extra
    # zero per side of the flattened image so every tap slice stays in bounds.
    xp = jnp.pad(x, ((0, 0), (0, 0), (PAD, PAD), (PAD, PAD)))          # (B,C,Hp,Wp)
    xp_flat = jnp.pad(xp.reshape(B, C, Hp * Wp), ((0, 0), (0, 0), (1, 1)))  # (B,C,L)

    # Fused depthwise+pointwise per-tap weights, computed in f32 then cast once.
    dw = dw_weight.reshape(C, KERNEL_SIZE * KERNEL_SIZE).astype(jnp.float32)  # (C, 9)
    pw = pw_weight.reshape(Cout, C).astype(jnp.float32)                       # (Cout, C)
    w_all = (pw[:, None, :] * dw.T[None, :, :])                               # (Cout, 9, C)
    w_all = w_all.reshape(Cout, KERNEL_SIZE * KERNEL_SIZE * C).astype(x.dtype)

    bt = _pick_batch_tile(B)
    steps = B // bt

    kernel = functools.partial(_sepconv_kernel, H=H, Wp=Wp, bt=bt)
    out_flat = pl.pallas_call(
        kernel,
        out_shape=jax.ShapeDtypeStruct((steps, Cout, bt * n_img), x.dtype),
        grid_spec=pltpu.PrefetchScalarGridSpec(
            num_scalar_prefetch=0,
            grid=(steps,),
            in_specs=[
                pl.BlockSpec((bt, C, L), lambda g: (g, 0, 0)),
                pl.BlockSpec((Cout, KERNEL_SIZE * KERNEL_SIZE * C),
                             lambda g: (0, 0)),          # resident fused weights
            ],
            out_specs=pl.BlockSpec((pl.Squeezed(), Cout, bt * n_img),
                                   lambda g: (g, 0, 0)),
        ),
        compiler_params=pltpu.CompilerParams(
            dimension_semantics=("parallel",) if steps > 1 else ("arbitrary",),
            vmem_limit_bytes=32 * 1024 * 1024),
    )(xp_flat, w_all)

    # (steps, Cout, bt*H*Wp) -> (B, Cout, H, W): drop padded border columns.
    out = out_flat.reshape(steps, Cout, bt, H, Wp)
    out = out.transpose(0, 2, 1, 3, 4).reshape(B, Cout, H, Wp)
    return out[:, :, :, PAD:PAD + W]


def _reference(x, dw_weight, pw_weight):
    # Pure-JAX reference matching torch semantics (NCHW, OIHW, cross-correlation).
    C = x.shape[1]
    y = lax.conv_general_dilated(
        x, dw_weight, window_strides=(1, 1), padding=((PAD, PAD), (PAD, PAD)),
        dimension_numbers=("NCHW", "OIHW", "NCHW"), feature_group_count=C)
    y = lax.conv_general_dilated(
        y, pw_weight, window_strides=(1, 1), padding=((0, 0), (0, 0)),
        dimension_numbers=("NCHW", "OIHW", "NCHW"))
    return y


if __name__ == "__main__":
    B, Cin, Cout, H, W = 2, 4, 8, 16, 16

    key = jax.random.PRNGKey(0)
    kx, kdw, kpw = jax.random.split(key, 3)
    x = jax.random.normal(kx, (B, Cin, H, W), dtype=jnp.float32)
    # Deterministic parameter init (shapes match nn.Conv2d weights, bias=False).
    dw_weight = jax.random.normal(kdw, (Cin, 1, KERNEL_SIZE, KERNEL_SIZE),
                                  dtype=jnp.float32) * 0.1
    pw_weight = jax.random.normal(kpw, (Cout, Cin, 1, 1), dtype=jnp.float32) * 0.1

    out = jax.block_until_ready(separable_conv2d(x, dw_weight, pw_weight))

    ref = _reference(x, dw_weight, pw_weight)
    assert out.shape == (B, Cout, H, W)
    assert jnp.allclose(out, ref, rtol=1e-3, atol=1e-3), "mismatch vs reference"

    # Extra guard for the flat-halo index math: non-square / odd spatial size.
    B2, C2, Co2, H2, W2 = 2, 4, 8, 7, 11
    k2x, k2d, k2p = jax.random.split(jax.random.PRNGKey(1), 3)
    x2 = jax.random.normal(k2x, (B2, C2, H2, W2), dtype=jnp.float32)
    dw2 = jax.random.normal(k2d, (C2, 1, 3, 3), dtype=jnp.float32) * 0.1
    pw2 = jax.random.normal(k2p, (Co2, C2, 1, 1), dtype=jnp.float32) * 0.1
    out2 = jax.block_until_ready(separable_conv2d(x2, dw2, pw2))
    assert jnp.allclose(out2, _reference(x2, dw2, pw2), rtol=1e-3, atol=1e-3), \
        "mismatch vs reference (odd sizes)"

    print("KERNEL_OK")
</pallas_src>

<mosaic_0001>
module attributes {stable_mosaic.version = 11 : i64} {
  func.func @_sepconv_kernel(%arg0: i32, %arg1: memref<2x4x326xf32, #tpu.memory_space<vmem>>, %arg2: memref<8x36xf32, #tpu.memory_space<vmem>>, %arg3: memref<1x8x576xf32, #tpu.memory_space<vmem>>) attributes {dimension_semantics = [#tpu.dimension_semantics<arbitrary>], iteration_bounds = array<i64: 1>, scalar_prefetch = 0 : i64, scratch_operands = 0 : i64, tpu.core_type = #tpu.core_type<tc>, window_params = [{transform_indices = @transform_0, window_bounds = array<i64: 2, 4, 326>}, {pipeline_mode = #tpu.pipeline_mode<synchronous>, transform_indices = @transform_1, window_bounds = array<i64: 8, 36>}, {transform_indices = @transform_2, window_bounds = array<i64: 1, 8, 576>}]} {
    %c0 = arith.constant 0 : index
    %c0_0 = arith.constant 0 : index
    %c0_1 = arith.constant 0 : index
    %0 = vector.load %arg1[%c0, %c0_0, %c0_1] : memref<2x4x326xf32, #tpu.memory_space<vmem>>, vector<1x4x326xf32>
    %1 = vector.shape_cast %0 : vector<1x4x326xf32> to vector<4x326xf32>
    %2 = vector.extract_strided_slice %1 {offsets = [0, 0], sizes = [4, 288], strides = [1, 1]} : vector<4x326xf32> to vector<4x288xf32>
    %3 = vector.extract_strided_slice %1 {offsets = [0, 1], sizes = [4, 288], strides = [1, 1]} : vector<4x326xf32> to vector<4x288xf32>
    %4 = vector.extract_strided_slice %1 {offsets = [0, 2], sizes = [4, 288], strides = [1, 1]} : vector<4x326xf32> to vector<4x288xf32>
    %5 = vector.extract_strided_slice %1 {offsets = [0, 18], sizes = [4, 288], strides = [1, 1]} : vector<4x326xf32> to vector<4x288xf32>
    %6 = vector.extract_strided_slice %1 {offsets = [0, 19], sizes = [4, 288], strides = [1, 1]} : vector<4x326xf32> to vector<4x288xf32>
    %7 = vector.extract_strided_slice %1 {offsets = [0, 20], sizes = [4, 288], strides = [1, 1]} : vector<4x326xf32> to vector<4x288xf32>
    %8 = vector.extract_strided_slice %1 {offsets = [0, 36], sizes = [4, 288], strides = [1, 1]} : vector<4x326xf32> to vector<4x288xf32>
    %9 = vector.extract_strided_slice %1 {offsets = [0, 37], sizes = [4, 288], strides = [1, 1]} : vector<4x326xf32> to vector<4x288xf32>
    %10 = vector.extract_strided_slice %1 {offsets = [0, 38], sizes = [4, 288], strides = [1, 1]} : vector<4x326xf32> to vector<4x288xf32>
    %11 = tpu.concatenate %2, %3, %4, %5, %6, %7, %8, %9, %10 in 0 : vector<4x288xf32>, vector<4x288xf32>, vector<4x288xf32>, vector<4x288xf32>, vector<4x288xf32>, vector<4x288xf32>, vector<4x288xf32>, vector<4x288xf32>, vector<4x288xf32> -> vector<36x288xf32>
    %c1 = arith.constant 1 : index
    %c0_2 = arith.constant 0 : index
    %c0_3 = arith.constant 0 : index
    %12 = vector.load %arg1[%c1, %c0_2, %c0_3] : memref<2x4x326xf32, #tpu.memory_space<vmem>>, vector<1x4x326xf32>
    %13 = vector.shape_cast %12 : vector<1x4x326xf32> to vector<4x326xf32>
    %14 = vector.extract_strided_slice %13 {offsets = [0, 0], sizes = [4, 288], strides = [1, 1]} : vector<4x326xf32> to vector<4x288xf32>
    %15 = vector.extract_strided_slice %13 {offsets = [0, 1], sizes = [4, 288], strides = [1, 1]} : vector<4x326xf32> to vector<4x288xf32>
    %16 = vector.extract_strided_slice %13 {offsets = [0, 2], sizes = [4, 288], strides = [1, 1]} : vector<4x326xf32> to vector<4x288xf32>
    %17 = vector.extract_strided_slice %13 {offsets = [0, 18], sizes = [4, 288], strides = [1, 1]} : vector<4x326xf32> to vector<4x288xf32>
    %18 = vector.extract_strided_slice %13 {offsets = [0, 19], sizes = [4, 288], strides = [1, 1]} : vector<4x326xf32> to vector<4x288xf32>
    %19 = vector.extract_strided_slice %13 {offsets = [0, 20], sizes = [4, 288], strides = [1, 1]} : vector<4x326xf32> to vector<4x288xf32>
    %20 = vector.extract_strided_slice %13 {offsets = [0, 36], sizes = [4, 288], strides = [1, 1]} : vector<4x326xf32> to vector<4x288xf32>
    %21 = vector.extract_strided_slice %13 {offsets = [0, 37], sizes = [4, 288], strides = [1, 1]} : vector<4x326xf32> to vector<4x288xf32>
    %22 = vector.extract_strided_slice %13 {offsets = [0, 38], sizes = [4, 288], strides = [1, 1]} : vector<4x326xf32> to vector<4x288xf32>
    %23 = tpu.concatenate %14, %15, %16, %17, %18, %19, %20, %21, %22 in 0 : vector<4x288xf32>, vector<4x288xf32>, vector<4x288xf32>, vector<4x288xf32>, vector<4x288xf32>, vector<4x288xf32>, vector<4x288xf32>, vector<4x288xf32>, vector<4x288xf32> -> vector<36x288xf32>
    %24 = tpu.concatenate %11, %23 in 1 : vector<36x288xf32>, vector<36x288xf32> -> vector<36x576xf32>
    %c0_4 = arith.constant 0 : index
    %c0_5 = arith.constant 0 : index
    %25 = vector.load %arg2[%c0_4, %c0_5] : memref<8x36xf32, #tpu.memory_space<vmem>>, vector<8x36xf32>
    %cst = arith.constant dense<0.000000e+00> : vector<8x576xf32>
    %26 = tpu.matmul %25, %24, %cst {dimension_numbers = #tpu.dot_dimension_numbers<[1], [0], [0], [1], [0, 0, 1, 1], [], []>} : vector<8x36xf32>, vector<36x576xf32>, vector<8x576xf32> -> vector<8x576xf32>
    %c0_6 = arith.constant 0 : index
    %c0_7 = arith.constant 0 : index
    %c0_8 = arith.constant 0 : index
    %27 = vector.load %arg3[%c0_6, %c0_7, %c0_8] : memref<1x8x576xf32, #tpu.memory_space<vmem>>, vector<1x8x576xf32>
    %28 = vector.shape_cast %27 : vector<1x8x576xf32> to vector<8x576xf32>
    %29 = vector.shape_cast %26 : vector<8x576xf32> to vector<1x8x576xf32>
    tpu.vector_store %arg3[%c0_6, %c0_7, %c0_8], %29 {strides = array<i32>} : memref<1x8x576xf32, #tpu.memory_space<vmem>>, vector<1x8x576xf32>,
    return
  }
  func.func @transform_0(%arg0: i32) -> (i32, i32, i32) {
    %c0_i32 = arith.constant 0 : i32
    %c0_i32_0 = arith.constant 0 : i32
    %c0_i32_1 = arith.constant 0 : i32
    return %arg0, %c0_i32, %c0_i32_0 : i32, i32, i32
  }
  func.func @transform_1(%arg0: i32) -> (i32, i32) {
    %c0_i32 = arith.constant 0 : i32
    %c0_i32_0 = arith.constant 0 : i32
    %c0_i32_1 = arith.constant 0 : i32
    return %c0_i32, %c0_i32_0 : i32, i32
  }
  func.func @transform_2(%arg0: i32) -> (i32, i32, i32) {
    %c0_i32 = arith.constant 0 : i32
    %c0_i32_0 = arith.constant 0 : i32
    %c0_i32_1 = arith.constant 0 : i32
    return %arg0, %c0_i32, %c0_i32_0 : i32, i32, i32
  }
}

</mosaic_0001>

<llo_original>
// kernel: tpu_custom_call.1
$region0: #{tpu_custom_call.1}
  #allocation0 [shape = 'u32[]', space=smem, size = 0x4, offset = 0x4, fixed_abs, tag = 'smem constant byte address 0x4 - core index']
  #allocation1 [shape = 'u32[144,128]{1,0:T(1,128)}', space=vmem, size = 0x12000, scoped, tag = 'internal scratch']
  %s0 = inlined_call_operand.hbm [shape: f32[2,4,326], index: 0, kind: input, shape index: {}]
  %s1 = inlined_call_operand.hbm [shape: f32[8,36], index: 1, kind: input, shape index: {}]
  %s2 = inlined_call_operand.hbm [shape: f32[1,8,576], index: 2, kind: output, shape index: {}]
  %s3 = sld [smem:[#allocation0]]
  $region26: #{tpu_custom_call.1} parent=0
    _
  %s5 = ssub.s32 1, %s3
  %s6 = scalar_select 0, %s5, %s3
  $region1: #{tpu_custom_call.1} parent=0
    #allocation2 [shape = 'u8[12288]{0}', space=vmem, size = 0x3000, scoped, tag = 'input window, operand 0, single buffered']
    #allocation3 [shape = 's32[1]{0}', space=sflag, size = 0x4, scoped, tag = 'scoped memory for tpu_custom_call.1']
    #allocation4 [shape = 's32[1]{0}', space=sflag, size = 0x4, scoped, tag = 'scoped memory for tpu_custom_call.1']
    #allocation5 [shape = 'u8[4096]{0}', space=vmem, size = 0x1000, scoped, tag = 'input window, operand 1, single buffered']
    #allocation6 [shape = 's32[1]{0}', space=sflag, size = 0x4, scoped, tag = 'scoped memory for tpu_custom_call.1']
    #allocation7 [shape = 'u8[20480]{0}', space=vmem, size = 0x5000, scoped, tag = 'output window, operand 0, single buffered']
    %7 = vsyncpa [#allocation3], 0
    %8 = vsyncpa [#allocation6], 0
    %9 = vsyncpa [#allocation4], 0
    // Predicated region
    $region2: #{tpu_custom_call.1} parent=1 // pred_check
      _
    $region3: #{tpu_custom_call.1} parent=1 // pred_check_branch
      %11 = sbr.rel (0) target = $region5
    $region4: #{tpu_custom_call.1} parent=1 // pred_region
      %s13 = ssub.s32 384, 384
      %14 = vsyncadd [#allocation3], %s13
      %s15 = sshll.u32 [#allocation2], 4
      %s16 = int_to_ptr.vmem [resolvable:$true] %s15
      %21 = dma.hbm_to_vmem [thread:$0]  %s0, 384, %s16, [#allocation3], 192, 192, 12
    $region5: #{tpu_custom_call.1} parent=1 // pred_fallthru
      _
    // Predicated region
    $region6: #{tpu_custom_call.1} parent=1 // pred_check
      _
    $region7: #{tpu_custom_call.1} parent=1 // pred_check_branch
      %23 = sbr.rel (0) target = $region9
    $region8: #{tpu_custom_call.1} parent=1 // pred_region
      %s25 = ssub.s32 128, 128
      %26 = vsyncadd [#allocation6], %s25
      %s28 = sshll.u32 [#allocation5], 4
      %s29 = int_to_ptr.vmem [resolvable:$true] %s28
      %31 = dma.hbm_to_vmem [thread:$0]  %s1, 128, %s29, [#allocation6]
    $region9: #{tpu_custom_call.1} parent=1 // pred_fallthru
      _
    // Predicated region
    $region10: #{tpu_custom_call.1} parent=1 // pred_check
      _
    $region11: #{tpu_custom_call.1} parent=1 // pred_check_branch
      %33 = sbr.rel (0) target = $region13
    $region12: #{tpu_custom_call.1} parent=1 // pred_region
      %34 = dma.done [#allocation3], 384
    $region13: #{tpu_custom_call.1} parent=1 // pred_fallthru
      _
    // Predicated region
    $region14: #{tpu_custom_call.1} parent=1 // pred_check
      _
    $region15: #{tpu_custom_call.1} parent=1 // pred_check_branch
      %36 = sbr.rel (0) target = $region17
    $region16: #{tpu_custom_call.1} parent=1 // pred_region
      %37 = dma.done [#allocation6], 128
    $region17: #{tpu_custom_call.1} parent=1 // pred_fallthru
      _
    %v38 = vld [vmem:[#allocation2] sm:$0xff]
    %v39 = vld [vmem:[#allocation2 + $0x8] sm:$0xf]
    %v42 = vcombine.high %v38, %v38
    %v44 = vcombine.low %v38, %v38
    %v45 = vcombine.low %v39, %v39
    %46 = vrot.lane.b32.xlu0 %v44, 127
    %v47 = vpop.permute.xlu0 %46
    %48 = vrot.lane.b32.xlu0 %v38, 127
    %v49 = vpop.permute.xlu0 %48
    %50 = vrot.lane.b32.xlu0 %v45, 127
    %v51 = vpop.permute.xlu0 %50
    %vm52 = vcmask 1039360
    %v53 = vsel %vm52, %v47, %v49
    %v54 = vsel %vm52, %v49, %v51
    %58 = vrot.lane.b32.xlu0 %v38, 126
    %v59 = vpop.permute.xlu0 %58
    %60 = vrot.lane.b32.xlu0 %v42, 126
    %v61 = vpop.permute.xlu0 %60
    %62 = vrot.lane.b32.xlu0 %v39, 126
    %v63 = vpop.permute.xlu0 %62
    %vm64 = vcmask 1031168
    %v65 = vsel %vm64, %v59, %v61
    %v66 = vsel %vm64, %v61, %v63
    %70 = vrot.lane.b32.xlu0 %v44, 110
    %v71 = vpop.permute.xlu0 %70
    %72 = vrot.lane.b32.xlu0 %v38, 110
    %v73 = vpop.permute.xlu0 %72
    %74 = vrot.lane.b32.xlu0 %v45, 110
    %v75 = vpop.permute.xlu0 %74
    %vm76 = vcmask 900096
    %v77 = vsel %vm76, %v71, %v73
    %v78 = vsel %vm76, %v73, %v75
    %82 = vrot.lane.b32.xlu0 %v38, 109
    %v83 = vpop.permute.xlu0 %82
    %84 = vrot.lane.b32.xlu0 %v42, 109
    %v85 = vpop.permute.xlu0 %84
    %86 = vrot.lane.b32.xlu0 %v39, 109
    %v87 = vpop.permute.xlu0 %86
    %vm88 = vcmask 891904
    %v89 = vsel %vm88, %v83, %v85
    %v90 = vsel %vm88, %v85, %v87
    %94 = vrot.lane.b32.xlu0 %v44, 108
    %v95 = vpop.permute.xlu0 %94
    %96 = vrot.lane.b32.xlu0 %v38, 108
    %v97 = vpop.permute.xlu0 %96
    %98 = vrot.lane.b32.xlu0 %v45, 108
    %v99 = vpop.permute.xlu0 %98
    %vm100 = vcmask 883712
    %v101 = vsel %vm100, %v95, %v97
    %v102 = vsel %vm100, %v97, %v99
    %106 = vrot.lane.b32.xlu0 %v38, 92
    %v107 = vpop.permute.xlu0 %106
    %108 = vrot.lane.b32.xlu0 %v42, 92
    %v109 = vpop.permute.xlu0 %108
    %110 = vrot.lane.b32.xlu0 %v39, 92
    %v111 = vpop.permute.xlu0 %110
    %vm112 = vcmask 752640
    %v113 = vsel %vm112, %v107, %v109
    %v114 = vsel %vm112, %v109, %v111
    %118 = vrot.lane.b32.xlu0 %v44, 91
    %v119 = vpop.permute.xlu0 %118
    %120 = vrot.lane.b32.xlu0 %v38, 91
    %v121 = vpop.permute.xlu0 %120
    %122 = vrot.lane.b32.xlu0 %v45, 91
    %v123 = vpop.permute.xlu0 %122
    %vm124 = vcmask 744448
    %v125 = vsel %vm124, %v119, %v121
    %v126 = vsel %vm124, %v121, %v123
    %130 = vrot.lane.b32.xlu0 %v38, 90
    %v131 = vpop.permute.xlu0 %130
    %132 = vrot.lane.b32.xlu0 %v42, 90
    %v133 = vpop.permute.xlu0 %132
    %134 = vrot.lane.b32.xlu0 %v39, 90
    %v135 = vpop.permute.xlu0 %134
    %vm136 = vcmask 736256
    %v137 = vsel %vm136, %v131, %v133
    %v138 = vsel %vm136, %v133, %v135
    %vm140 = vcmask 1043456
    %v141 = vsel %vm140, %v38, %v53
    %v142 = vsel %vm140, %v42, %v54
    %v143 = vsel %vm140, %v39, %v51
    %v144 = vsel %vm140, %v65, %v77
    %v145 = vsel %vm140, %v66, %v78
    %v146 = vsel %vm140, %v63, %v75
    %v147 = vsel %vm140, %v89, %v101
    %v148 = vsel %vm140, %v90, %v102
    %v149 = vsel %vm140, %v87, %v99
    %v150 = vsel %vm140, %v113, %v125
    %v151 = vsel %vm140, %v114, %v126
    %v152 = vsel %vm140, %v111, %v123
    %s153 = scalar_lea.vmem [#allocation2], 12
    %v154 = vld [vmem:[%s153] sm:$0xff]
    %v155 = vld [vmem:[%s153 + $0x8] sm:$0xf]
    %v158 = vcombine.high %v154, %v154
    %v160 = vcombine.low %v154, %v154
    %v161 = vcombine.low %v155, %v155
    %162 = vrot.lane.b32.xlu0 %v160, 127
    %v163 = vpop.permute.xlu0 %162
    %164 = vrot.lane.b32.xlu0 %v154, 127
    %v165 = vpop.permute.xlu0 %164
    %166 = vrot.lane.b32.xlu0 %v161, 127
    %v167 = vpop.permute.xlu0 %166
    %v168 = vsel %vm52, %v163, %v165
    %v169 = vsel %vm52, %v165, %v167
    %173 = vrot.lane.b32.xlu0 %v154, 126
    %v174 = vpop.permute.xlu0 %173
    %175 = vrot.lane.b32.xlu0 %v158, 126
    %v176 = vpop.permute.xlu0 %175
    %177 = vrot.lane.b32.xlu0 %v155, 126
    %v178 = vpop.permute.xlu0 %177
    %v179 = vsel %vm64, %v174, %v176
    %v180 = vsel %vm64, %v176, %v178
    %184 = vrot.lane.b32.xlu0 %v160, 110
    %v185 = vpop.permute.xlu0 %184
    %186 = vrot.lane.b32.xlu0 %v154, 110
    %v187 = vpop.permute.xlu0 %186
    %188 = vrot.lane.b32.xlu0 %v161, 110
    %v189 = vpop.permute.xlu0 %188
    %v190 = vsel %vm76, %v185, %v187
    %v191 = vsel %vm76, %v187, %v189
    %195 = vrot.lane.b32.xlu0 %v154, 109
    %v196 = vpop.permute.xlu0 %195
    %197 = vrot.lane.b32.xlu0 %v158, 109
    %v198 = vpop.permute.xlu0 %197
    %199 = vrot.lane.b32.xlu0 %v155, 109
    %v200 = vpop.permute.xlu0 %199
    %v201 = vsel %vm88, %v196, %v198
    %v202 = vsel %vm88, %v198, %v200
    %206 = vrot.lane.b32.xlu0 %v160, 108
    %v207 = vpop.permute.xlu0 %206
    %208 = vrot.lane.b32.xlu0 %v154, 108
    %v209 = vpop.permute.xlu0 %208
    %210 = vrot.lane.b32.xlu0 %v161, 108
    %v211 = vpop.permute.xlu0 %210
    %v212 = vsel %vm100, %v207, %v209
    %v213 = vsel %vm100, %v209, %v211
    %217 = vrot.lane.b32.xlu0 %v154, 92
    %v218 = vpop.permute.xlu0 %217
    %219 = vrot.lane.b32.xlu0 %v158, 92
    %v220 = vpop.permute.xlu0 %219
    %221 = vrot.lane.b32.xlu0 %v155, 92
    %v222 = vpop.permute.xlu0 %221
    %v223 = vsel %vm112, %v218, %v220
    %v224 = vsel %vm112, %v220, %v222
    %228 = vrot.lane.b32.xlu0 %v160, 91
    %v229 = vpop.permute.xlu0 %228
    %230 = vrot.lane.b32.xlu0 %v154, 91
    %v231 = vpop.permute.xlu0 %230
    %232 = vrot.lane.b32.xlu0 %v161, 91
    %v233 = vpop.permute.xlu0 %232
    %v234 = vsel %vm124, %v229, %v231
    %v235 = vsel %vm124, %v231, %v233
    %239 = vrot.lane.b32.xlu0 %v154, 90
    %v240 = vpop.permute.xlu0 %239
    %241 = vrot.lane.b32.xlu0 %v158, 90
    %v242 = vpop.permute.xlu0 %241
    %243 = vrot.lane.b32.xlu0 %v155, 90
    %v244 = vpop.permute.xlu0 %243
    %v245 = vsel %vm136, %v240, %v242
    %v246 = vsel %vm136, %v242, %v244
    %v247 = vsel %vm140, %v154, %v168
    %v248 = vsel %vm140, %v158, %v169
    %v249 = vsel %vm140, %v155, %v167
    %v250 = vsel %vm140, %v179, %v190
    %v251 = vsel %vm140, %v180, %v191
    %v252 = vsel %vm140, %v178, %v189
    %v253 = vsel %vm140, %v201, %v212
    %v254 = vsel %vm140, %v202, %v213
    %v255 = vsel %vm140, %v200, %v211
    %v256 = vsel %vm140, %v223, %v234
    %v257 = vsel %vm140, %v224, %v235
    %v258 = vsel %vm140, %v222, %v233
    %271 = vrot.lane.b32.xlu0 %v247, 32
    %v272 = vpop.permute.xlu0 %271
    %273 = vrot.lane.b32.xlu0 %v248, 32
    %v274 = vpop.permute.xlu0 %273
    %275 = vrot.lane.b32.xlu0 %v249, 32
    %v276 = vpop.permute.xlu0 %275
    %277 = vrot.lane.b32.xlu0 %v250, 32
    %v278 = vpop.permute.xlu0 %277
    %279 = vrot.lane.b32.xlu0 %v251, 32
    %v280 = vpop.permute.xlu0 %279
    %281 = vrot.lane.b32.xlu0 %v252, 32
    %v282 = vpop.permute.xlu0 %281
    %283 = vrot.lane.b32.xlu0 %v253, 32
    %v284 = vpop.permute.xlu0 %283
    %285 = vrot.lane.b32.xlu0 %v254, 32
    %v286 = vpop.permute.xlu0 %285
    %287 = vrot.lane.b32.xlu0 %v255, 32
    %v288 = vpop.permute.xlu0 %287
    %289 = vrot.lane.b32.xlu0 %v256, 32
    %v290 = vpop.permute.xlu0 %289
    %291 = vrot.lane.b32.xlu0 %v257, 32
    %v292 = vpop.permute.xlu0 %291
    %293 = vrot.lane.b32.xlu0 %v258, 32
    %v294 = vpop.permute.xlu0 %293
    %295 = vrot.lane.b32.xlu0 %v245, 32
    %v296 = vpop.permute.xlu0 %295
    %297 = vrot.lane.b32.xlu0 %v246, 32
    %v298 = vpop.permute.xlu0 %297
    %299 = vrot.lane.b32.xlu0 %v244, 32
    %v300 = vpop.permute.xlu0 %299
    %vm301 = vcmask 261120
    %v302 = vsel %vm301, %v272, %v274
    %v303 = vsel %vm301, %v274, %v276
    %v304 = vsel %vm301, %v278, %v280
    %v305 = vsel %vm301, %v280, %v282
    %v306 = vsel %vm301, %v284, %v286
    %v307 = vsel %vm301, %v286, %v288
    %v308 = vsel %vm301, %v290, %v292
    %v309 = vsel %vm301, %v292, %v294
    %v310 = vsel %vm301, %v296, %v298
    %v311 = vsel %vm301, %v298, %v300
    %v325 = vsel %vm301, %v143, %v272
    %v326 = vsel %vm301, %v146, %v278
    %v327 = vsel %vm301, %v149, %v284
    %v328 = vsel %vm301, %v152, %v290
    %v329 = vsel %vm301, %v135, %v296
    %v330 = vld [vmem:[#allocation5] sm:$0xff]
    %vm331 = vcmask 293888
    %v333 = vsel %vm331, %v330, 0
    %v335 = vsel %vm140, %v137, 0
    %v337 = vsel %vm140, %v138, 0
    %v340 = vsel %vm140, %v329, 0
    %v342 = vsel %vm140, %v310, 0
    %v344 = vsel %vm140, %v311, 0
    %346 = vmatprep.subr.mxu0 %v142
    %347 = vmatpush1.msra.mxu0 %v141
    %348 = vmatprep.subr.mxu0 %v145
    %349 = vmatpush1.msra.mxu0 %v144
    %350 = vmatprep.subr.mxu0 %v148
    %351 = vmatpush1.msra.mxu0 %v147
    %352 = vmatprep.subr.mxu0 %v151
    %353 = vmatpush1.msra.mxu0 %v150
    %354 = vmatprep.subr.mxu0 %v337
    %355 = vmatpush1.msra.mxu0 %v335
    %356 = vmatprep.subr.mxu0 0.0
    %357 = vmatpush1.msra.mxu0 0.0
    %358 = vmatprep.subr.mxu0 0.0
    %359 = vmatpush1.msra.mxu0 0.0
    %360 = vmatprep.subr.mxu0 0.0
    %361 = vmatpush1.msra.mxu0 0.0
    %362 = vmatprep.subr.mxu0 0.0
    %363 = vmatpush1.msra.mxu0 0.0
    %364 = vmatprep.subr.mxu0 0.0
    %365 = vmatpush1.msra.mxu0 0.0
    %366 = vmatprep.subr.mxu0 0.0
    %367 = vmatpush1.msra.mxu0 0.0
    %368 = vmatprep.subr.mxu0 0.0
    %369 = vmatpush1.msra.mxu0 0.0
    %370 = vmatprep.subr.mxu0 0.0
    %371 = vmatpush1.msra.mxu0 0.0
    %372 = vmatprep.subr.mxu0 0.0
    %373 = vmatpush1.msra.mxu0 0.0
    %374 = vmatprep.subr.mxu0 0.0
    %375 = vmatpush1.msra.mxu0 0.0
    %376 = vmatprep.subr.mxu0 0.0
    %377 = vmatpush1.msra.mxu0 0.0
    %378 = vmatprep.subr.mxu0 0.0
    %379 = vmatpush1.msra.mxu0 0.0
    %380 = vmatprep.subr.mxu0 0.0
    %381 = vmatpush1.msra.mxu0 0.0
    %382 = vmatprep.subr.mxu0 0.0
    %383 = vmatpush1.msra.mxu0 0.0
    %384 = vmatprep.subr.mxu0 0.0
    %385 = vmatpush1.msra.mxu0 0.0
    %386 = vmatprep.subr.mxu0 0.0
    %387 = vmatpush1.msra.mxu0 0.0
    %388 = vmatprep.subr.mxu0 0.0
    %389 = vmatpush1.msra.mxu0 0.0
    %390 = vmatprep.subr.mxu0 0.0
    %391 = vmatpush1.msra.mxu0 0.0
    %392 = vmatprep.subr.mxu0 0.0
    %393 = vmatpush1.msra.mxu0 0.0
    %394 = vmatprep.subr.mxu0 0.0
    %395 = vmatpush1.msra.mxu0 0.0
    %396 = vmatprep.subr.mxu0 0.0
    %397 = vmatpush1.msra.mxu0 0.0
    %398 = vmatprep.subr.mxu0 0.0
    %399 = vmatpush1.msra.mxu0 0.0
    %400 = vmatprep.subr.mxu0 0.0
    %401 = vmatpush1.msra.mxu0 0.0
    %402 = vmatprep.subr.mxu0 0.0
    %403 = vmatpush1.msra.mxu0 0.0
    %404 = vmatprep.subr.mxu0 0.0
    %405 = vmatpush1.msra.mxu0 0.0
    %406 = vmatprep.subr.mxu0 0.0
    %407 = vmatpush1.msra.mxu0 0.0
    %408 = vmatprep.subr.mxu0 0.0
    %409 = vmatpush1.msra.mxu0 0.0
    %410 = vmatprep.mubr.f32.mxu0 0.0
    %411 = vmatmul.mubr.f32.gmra.mrb[0].mxu0 %v333
    %v412 = vpop.f32.mrb[0].mxu0
    %v413 = vadd.f32 0.0, %v412
    %v414 = vpop.f32.mrb[0].mxu0
    %v415 = vadd.f32 0.0, %v414
    %416 = vdwg.mxu0
    %417 = vmatprep.subr.mxu0 %v302
    %418 = vmatpush1.msra.mxu0 %v325
    %419 = vmatprep.subr.mxu0 %v304
    %420 = vmatpush1.msra.mxu0 %v326
    %421 = vmatprep.subr.mxu0 %v306
    %422 = vmatpush1.msra.mxu0 %v327
    %423 = vmatprep.subr.mxu0 %v308
    %424 = vmatpush1.msra.mxu0 %v328
    %425 = vmatprep.subr.mxu0 %v342
    %426 = vmatpush1.msra.mxu0 %v340
    %427 = vmatprep.subr.mxu0 0.0
    %428 = vmatpush1.msra.mxu0 0.0
    %429 = vmatprep.subr.mxu0 0.0
    %430 = vmatpush1.msra.mxu0 0.0
    %431 = vmatprep.subr.mxu0 0.0
    %432 = vmatpush1.msra.mxu0 0.0
    %433 = vmatprep.subr.mxu0 0.0
    %434 = vmatpush1.msra.mxu0 0.0
    %435 = vmatprep.subr.mxu0 0.0
    %436 = vmatpush1.msra.mxu0 0.0
    %437 = vmatprep.subr.mxu0 0.0
    %438 = vmatpush1.msra.mxu0 0.0
    %439 = vmatprep.subr.mxu0 0.0
    %440 = vmatpush1.msra.mxu0 0.0
    %441 = vmatprep.subr.mxu0 0.0
    %442 = vmatpush1.msra.mxu0 0.0
    %443 = vmatprep.subr.mxu0 0.0
    %444 = vmatpush1.msra.mxu0 0.0
    %445 = vmatprep.subr.mxu0 0.0
    %446 = vmatpush1.msra.mxu0 0.0
    %447 = vmatprep.subr.mxu0 0.0
    %448 = vmatpush1.msra.mxu0 0.0
    %449 = vmatprep.subr.mxu0 0.0
    %450 = vmatpush1.msra.mxu0 0.0
    %451 = vmatprep.subr.mxu0 0.0
    %452 = vmatpush1.msra.mxu0 0.0
    %453 = vmatprep.subr.mxu0 0.0
    %454 = vmatpush1.msra.mxu0 0.0
    %455 = vmatprep.subr.mxu0 0.0
    %456 = vmatpush1.msra.mxu0 0.0
    %457 = vmatprep.subr.mxu0 0.0
    %458 = vmatpush1.msra.mxu0 0.0
    %459 = vmatprep.subr.mxu0 0.0
    %460 = vmatpush1.msra.mxu0 0.0
    %461 = vmatprep.subr.mxu0 0.0
    %462 = vmatpush1.msra.mxu0 0.0
    %463 = vmatprep.subr.mxu0 0.0
    %464 = vmatpush1.msra.mxu0 0.0
    %465 = vmatprep.subr.mxu0 0.0
    %466 = vmatpush1.msra.mxu0 0.0
    %467 = vmatprep.subr.mxu0 0.0
    %468 = vmatpush1.msra.mxu0 0.0
    %469 = vmatprep.subr.mxu0 0.0
    %470 = vmatpush1.msra.mxu0 0.0
    %471 = vmatprep.subr.mxu0 0.0
    %472 = vmatpush1.msra.mxu0 0.0
    %473 = vmatprep.subr.mxu0 0.0
    %474 = vmatpush1.msra.mxu0 0.0
    %475 = vmatprep.subr.mxu0 0.0
    %476 = vmatpush1.msra.mxu0 0.0
    %477 = vmatprep.subr.mxu0 0.0
    %478 = vmatpush1.msra.mxu0 0.0
    %479 = vmatprep.subr.mxu0 0.0
    %480 = vmatpush1.msra.mxu0 0.0
    %481 = vmatprep.mubr.f32.mxu0 0.0
    %482 = vmatmul.mubr.f32.gmra.mrb[0].mxu0 %v333
    %v483 = vpop.f32.mrb[0].mxu0
    %v484 = vadd.f32 0.0, %v483
    %v485 = vpop.f32.mrb[0].mxu0
    %v486 = vadd.f32 0.0, %v485
    %487 = vdwg.mxu0
    %488 = vmatprep.subr.mxu0 0.0
    %489 = vmatpush1.msra.mxu0 %v303
    %490 = vmatprep.subr.mxu0 0.0
    %491 = vmatpush1.msra.mxu0 %v305
    %492 = vmatprep.subr.mxu0 0.0
    %493 = vmatpush1.msra.mxu0 %v307
    %494 = vmatprep.subr.mxu0 0.0
    %495 = vmatpush1.msra.mxu0 %v309
    %496 = vmatprep.subr.mxu0 0.0
    %497 = vmatpush1.msra.mxu0 %v344
    %498 = vmatprep.subr.mxu0 0.0
    %499 = vmatpush1.msra.mxu0 0.0
    %500 = vmatprep.subr.mxu0 0.0
    %501 = vmatpush1.msra.mxu0 0.0
    %502 = vmatprep.subr.mxu0 0.0
    %503 = vmatpush1.msra.mxu0 0.0
    %504 = vmatprep.subr.mxu0 0.0
    %505 = vmatpush1.msra.mxu0 0.0
    %506 = vmatprep.subr.mxu0 0.0
    %507 = vmatpush1.msra.mxu0 0.0
    %508 = vmatprep.subr.mxu0 0.0
    %509 = vmatpush1.msra.mxu0 0.0
    %510 = vmatprep.subr.mxu0 0.0
    %511 = vmatpush1.msra.mxu0 0.0
    %512 = vmatprep.subr.mxu0 0.0
    %513 = vmatpush1.msra.mxu0 0.0
    %514 = vmatprep.subr.mxu0 0.0
    %515 = vmatpush1.msra.mxu0 0.0
    %516 = vmatprep.subr.mxu0 0.0
    %517 = vmatpush1.msra.mxu0 0.0
    %518 = vmatprep.subr.mxu0 0.0
    %519 = vmatpush1.msra.mxu0 0.0
    %520 = vmatprep.subr.mxu0 0.0
    %521 = vmatpush1.msra.mxu0 0.0
    %522 = vmatprep.subr.mxu0 0.0
    %523 = vmatpush1.msra.mxu0 0.0
    %524 = vmatprep.subr.mxu0 0.0
    %525 = vmatpush1.msra.mxu0 0.0
    %526 = vmatprep.subr.mxu0 0.0
    %527 = vmatpush1.msra.mxu0 0.0
    %528 = vmatprep.subr.mxu0 0.0
    %529 = vmatpush1.msra.mxu0 0.0
    %530 = vmatprep.subr.mxu0 0.0
    %531 = vmatpush1.msra.mxu0 0.0
    %532 = vmatprep.subr.mxu0 0.0
    %533 = vmatpush1.msra.mxu0 0.0
    %534 = vmatprep.subr.mxu0 0.0
    %535 = vmatpush1.msra.mxu0 0.0
    %536 = vmatprep.subr.mxu0 0.0
    %537 = vmatpush1.msra.mxu0 0.0
    %538 = vmatprep.subr.mxu0 0.0
    %539 = vmatpush1.msra.mxu0 0.0
    %540 = vmatprep.subr.mxu0 0.0
    %541 = vmatpush1.msra.mxu0 0.0
    %542 = vmatprep.subr.mxu0 0.0
    %543 = vmatpush1.msra.mxu0 0.0
    %544 = vmatprep.subr.mxu0 0.0
    %545 = vmatpush1.msra.mxu0 0.0
    %546 = vmatprep.subr.mxu0 0.0
    %547 = vmatpush1.msra.mxu0 0.0
    %548 = vmatprep.subr.mxu0 0.0
    %549 = vmatpush1.msra.mxu0 0.0
    %550 = vmatprep.subr.mxu0 0.0
    %551 = vmatpush1.msra.mxu0 0.0
    %552 = vmatprep.mubr.f32.mxu0 0.0
    %553 = vmatmul.mubr.f32.gmra.mrb[0].mxu0 %v333
    %v554 = vpop.f32.mrb[0].mxu0
    %v555 = vadd.f32 0.0, %v554
    %v556 = vpop.f32.mrb[0].mxu0
    %557 = vdwg.mxu0
    %558 = vst [vmem:[#allocation7] sm:$0xff] %v413
    %559 = vst [vmem:[#allocation7 + $0x8] sm:$0xff] %v415
    %560 = vst [vmem:[#allocation7 + $0x10] sm:$0xff] %v484
    %561 = vst [vmem:[#allocation7 + $0x18] sm:$0xff] %v486
    %vm562 = vcmask 523264
    %563 = vst.msk [vmem:[#allocation7 + $0x20] sm:$0xff] %vm562, %v555
    // Predicated region
    $region18: #{tpu_custom_call.1} parent=1 // pred_check
      _
    $region19: #{tpu_custom_call.1} parent=1 // pred_check_branch
      %565 = sbr.rel (0) target = $region21
    $region20: #{tpu_custom_call.1} parent=1 // pred_region
      %s567 = ssub.s32 640, 640
      %568 = vsyncadd [#allocation4], %s567
      %s570 = sshll.u32 [#allocation7], 4
      %s571 = int_to_ptr.vmem [resolvable:$true] %s570
      %573 = dma.vmem_to_hbm [thread:$0]  %s571, 640, %s2, [#allocation4]
    $region21: #{tpu_custom_call.1} parent=1 // pred_fallthru
      _
    // Predicated region
    $region22: #{tpu_custom_call.1} parent=1 // pred_check
      _
    $region23: #{tpu_custom_call.1} parent=1 // pred_check_branch
      %575 = sbr.rel (0) target = $region25
    $region24: #{tpu_custom_call.1} parent=1 // pred_region
      %576 = dma.done [#allocation4], 640
    $region25: #{tpu_custom_call.1} parent=1 // pred_fallthru
      _
    %577 = vsyncpa [#allocation3], 1
    %578 = vsyncpa [#allocation6], 1
    %579 = vsyncpa [#allocation4], 1

</llo_original>
